<compile_context>
chip_gen: v5e
topology: v5e:2x2
jax: 0.10.0
libtpu: 0.0.40
codegen_flags: <defaults>
</compile_context>

<pallas_src>
import jax
import jax.numpy as jnp
from jax import lax
from jax.experimental import pallas as pl
from jax.experimental.pallas import tpu as pltpu

_SENTINEL = 1.0e6  # finite "far away" coordinate for padded point slots


def _round_up(x, m):
    return ((x + m - 1) // m) * m


def _make_kernel(b_blk, n_rows, n_cols, r_pad, c_tile, n_chunks,
                 batch_unroll, chunk_unroll):
    need_row_mask = (r_pad != n_rows)
    need_col_mask = (n_chunks * c_tile != n_cols)

    def kernel(rows_ref, cols_ref, out_ref):
        # rows_ref: (b_blk, r_pad, 8)  augmented row points (MXU LHS, rows on sublanes)
        # cols_ref: (b_blk, 8, c_pad)  augmented col points (MXU RHS, cols on lanes)
        # out_ref:  (8, 128)           [0,0]=sum of per-col mins, [0,1]=per-row mins
        if need_row_mask:
            row_valid = lax.broadcasted_iota(jnp.int32, (r_pad, 1), 0) < n_rows

        def batch_body(b, carry):
            col_acc, row_acc = carry
            lhs = rows_ref[b]                                   # (r_pad, 8)

            def chunk_body(c, ccarry):
                c_sum, rmin = ccarry
                c0 = pl.multiple_of(c * c_tile, 128)
                rhs = cols_ref[b, :, pl.ds(c0, c_tile)]          # (8, c_tile)
                # |r|^2 - 2 r.c + |c|^2 on the MXU; clamp tiny negative cancellation.
                d2 = jnp.dot(lhs, rhs, preferred_element_type=jnp.float32)
                d2 = jnp.maximum(d2, 0.0)                        # (r_pad, c_tile)
                # nearest row point for every col point (final for this chunk).
                d_col = jnp.sqrt(jnp.min(d2, axis=0, keepdims=True))
                if need_col_mask:
                    col_idx = c0 + lax.broadcasted_iota(jnp.int32, (1, c_tile), 1)
                    d_col = jnp.where(col_idx < n_cols, d_col, 0.0)
                c_sum = c_sum + jnp.sum(d_col)
                # running min over cols for every row point.
                rmin = jnp.minimum(rmin, jnp.min(d2, axis=1, keepdims=True))
                return c_sum, rmin

            init = (jnp.zeros((), jnp.float32),
                    jnp.full((r_pad, 1), jnp.inf, jnp.float32))
            c_sum, rmin = lax.fori_loop(0, n_chunks, chunk_body, init,
                                        unroll=chunk_unroll)
            d_row = jnp.sqrt(rmin)
            if need_row_mask:
                d_row = jnp.where(row_valid, d_row, 0.0)
            return col_acc + c_sum, row_acc + jnp.sum(d_row)

        col_total, row_total = lax.fori_loop(
            0, b_blk, batch_body,
            (jnp.zeros((), jnp.float32), jnp.zeros((), jnp.float32)),
            unroll=batch_unroll)

        # Single dense lane-major store per grid step; scalars land in lanes 0/1.
        sub = lax.broadcasted_iota(jnp.int32, (8, 128), 0)
        lane = lax.broadcasted_iota(jnp.int32, (8, 128), 1)
        out_ref[...] = jnp.where((sub == 0) & (lane == 0), col_total,
                                 jnp.where((sub == 0) & (lane == 1), row_total, 0.0))

    return kernel


def _augment(points, n_pad, p_pad, lhs):
    """Sentinel-pad point slots, zero-pad batches, build the cdist-augmented matrix."""
    n, p, _ = points.shape
    pts = jnp.pad(points, ((0, 0), (0, p_pad - p), (0, 0)),
                  constant_values=_SENTINEL)          # padded points: far & finite
    pts = jnp.pad(pts, ((0, n_pad - n), (0, 0), (0, 0)))  # padded batches: all-zero
    x, y = pts[..., 0], pts[..., 1]
    sq = x * x + y * y
    one = jnp.ones_like(x)
    zero = jnp.zeros_like(x)
    if lhs:
        cols = [sq, -2.0 * x, -2.0 * y, one, zero, zero, zero, zero]
        return jnp.stack(cols, axis=-1)               # (n_pad, p_pad, 8)
    cols = [one, x, y, sq, zero, zero, zero, zero]
    return jnp.transpose(jnp.stack(cols, axis=-1), (0, 2, 1))  # (n_pad, 8, p_pad)


def hausdorff_loss(pred_points, gt_points, *, batch_block=8):
    """pred_points: (N, M, 2), gt_points: (N, K, 2) -> scalar Hausdorff loss."""
    n, m, dm = pred_points.shape
    n2, k, dk = gt_points.shape
    assert n == n2 and dm == 2 and dk == 2

    pred = pred_points.astype(jnp.float32)
    gt = gt_points.astype(jnp.float32)

    # Larger point set -> lane axis (cols), smaller -> sublane axis (rows).
    if m >= k:
        rows_pts, n_rows = gt, k
        cols_pts, n_cols = pred, m
    else:
        rows_pts, n_rows = pred, m
        cols_pts, n_cols = gt, k

    r_pad = _round_up(n_rows, 8)

    # Lane-axis tiling: keep each (r_pad, c_tile) d2 chunk around <= 4 MiB of f32.
    c_cap = max(128, ((1 << 20) // r_pad) // 128 * 128)
    c_tile = min(_round_up(n_cols, 128), c_cap, 2048)
    c_pad = _round_up(n_cols, c_tile)
    n_chunks = c_pad // c_tile
    # TODO(synk): add a second (row) tiling level for min(M,K) >~ 8K points.

    # Adaptive batch blocking: block+unroll only when the per-batch working set is
    # small; always leave >= 2 grid steps so v7x's second TensorCore has work.
    small_tile = (n_chunks == 1) and ((r_pad // 8) * (c_tile // 128) <= 16)
    b_blk = batch_block if small_tile else 1
    b_blk = max(1, min(b_blk, (n + 1) // 2))
    n_pad = _round_up(n, b_blk)
    g = n_pad // b_blk
    batch_unroll = small_tile and b_blk > 1
    chunk_unroll = n_chunks <= 2

    rows_aug = _augment(rows_pts, n_pad, r_pad, lhs=True)    # (n_pad, r_pad, 8)
    cols_aug = _augment(cols_pts, n_pad, c_pad, lhs=False)   # (n_pad, 8, c_pad)

    kernel = _make_kernel(b_blk, n_rows, n_cols, r_pad, c_tile, n_chunks,
                          batch_unroll, chunk_unroll)

    # Only raise the scoped-VMEM limit when the working set needs it (v5e default
    # is 16 MiB); cap below v7x's 64 MiB physical VMEM.
    est = (2 * 2 * b_blk * (r_pad * 8 + 8 * c_pad) * 4        # double-buffered inputs
           + 2 * r_pad * c_tile * 4                           # d2 chunk + slack
           + 2 * 8 * 128 * 4)                                 # output block
    cp_kwargs = dict(dimension_semantics=("parallel",))
    if est > 12 * (1 << 20):
        cp_kwargs["vmem_limit_bytes"] = int(min(2 * est, 56 * (1 << 20)))

    out = pl.pallas_call(
        kernel,
        out_shape=jax.ShapeDtypeStruct((g, 8, 128), jnp.float32),
        grid_spec=pltpu.PrefetchScalarGridSpec(
            num_scalar_prefetch=0,
            grid=(g,),
            in_specs=[
                pl.BlockSpec((b_blk, r_pad, 8), lambda i: (i, 0, 0)),
                pl.BlockSpec((b_blk, 8, c_pad), lambda i: (i, 0, 0)),
            ],
            out_specs=pl.BlockSpec((None, 8, 128), lambda i: (i, 0, 0)),
        ),
        compiler_params=pltpu.CompilerParams(**cp_kwargs),
    )(rows_aug, cols_aug)

    col_total = jnp.sum(out[:, 0, 0])   # sum over col points of nearest-row dists
    row_total = jnp.sum(out[:, 0, 1])   # sum over row points of nearest-col dists
    # mean over (N, n_cols) + mean over (N, n_rows) == d_s_t.mean() + d_t_s.mean()
    # TODO(synk): add a custom_vjp if this loss is used for training (no autodiff
    # rule is defined for this pallas_call).
    return col_total / (n * n_cols) + row_total / (n * n_rows)


def _reference_loss(pred_points, gt_points):
    # Pure-JAX reference mirroring torch.cdist + min/mean (exact elementwise f32).
    diff = pred_points[:, :, None, :] - gt_points[:, None, :, :]   # (N, M, K, 2)
    d = jnp.sqrt(jnp.sum(diff.astype(jnp.float32) ** 2, axis=-1))  # (N, M, K)
    d_s_t = jnp.min(d, axis=1)                                     # (N, K)
    d_t_s = jnp.min(d, axis=2)                                     # (N, M)
    return jnp.mean(d_s_t) + jnp.mean(d_t_s)


if __name__ == "__main__":
    key = jax.random.PRNGKey(0)
    k1, k2 = jax.random.split(key)

    N, M, K = 2, 16, 8
    pred_points = jax.random.uniform(k1, (N, M, 2), dtype=jnp.float32)
    gt_points = jax.random.uniform(k2, (N, K, 2), dtype=jnp.float32)

    loss = jax.block_until_ready(hausdorff_loss(pred_points, gt_points))
    ref = jax.block_until_ready(_reference_loss(pred_points, gt_points))
    assert jnp.allclose(loss, ref, rtol=2e-4, atol=2e-5), (loss, ref)

    print("KERNEL_OK")
</pallas_src>

<mosaic_0001>
module attributes {stable_mosaic.version = 11 : i64} {
  func.func @kernel(%arg0: i32, %arg1: memref<1x8x8xf32, #tpu.memory_space<vmem>>, %arg2: memref<1x8x128xf32, #tpu.memory_space<vmem>>, %arg3: memref<1x8x128xf32, #tpu.memory_space<vmem>>) attributes {dimension_semantics = [#tpu.dimension_semantics<parallel>], iteration_bounds = array<i64: 2>, scalar_prefetch = 0 : i64, scratch_operands = 0 : i64, tpu.core_type = #tpu.core_type<tc>, window_params = [{transform_indices = @transform_0, window_bounds = array<i64: 1, 8, 8>}, {transform_indices = @transform_1, window_bounds = array<i64: 1, 8, 128>}, {transform_indices = @transform_2, window_bounds = array<i64: 1, 8, 128>}]} {
    %cst = arith.constant 0.000000e+00 : f32
    %cst_0 = arith.constant 0.000000e+00 : f32
    %c0_i32 = arith.constant 0 : i32
    %0 = arith.index_cast %c0_i32 : i32 to index
    %c0 = arith.constant 0 : index
    %c0_1 = arith.constant 0 : index
    %1 = vector.load %arg1[%0, %c0, %c0_1] : memref<1x8x8xf32, #tpu.memory_space<vmem>>, vector<1x8x8xf32>
    %2 = vector.shape_cast %1 : vector<1x8x8xf32> to vector<8x8xf32>
    %cst_2 = arith.constant 0x7F800000 : f32
    %3 = vector.broadcast %cst_2 : f32 to vector<8x1xf32>
    %cst_3 = arith.constant 0.000000e+00 : f32
    %c0_i32_4 = arith.constant 0 : i32
    %c128_i32 = arith.constant 128 : i32
    %4 = arith.muli %c0_i32_4, %c128_i32 : i32
    %5 = tpu.assume_multiple %4, 128 : i32
    %6 = arith.index_cast %c0_i32 : i32 to index
    %c0_5 = arith.constant 0 : index
    %7 = arith.index_cast %5 : i32 to index
    %8 = vector.load %arg2[%6, %c0_5, %7] : memref<1x8x128xf32, #tpu.memory_space<vmem>>, vector<1x8x128xf32>
    %9 = vector.shape_cast %8 : vector<1x8x128xf32> to vector<8x128xf32>
    %cst_6 = arith.constant dense<0.000000e+00> : vector<8x128xf32>
    %10 = tpu.matmul %2, %9, %cst_6 {dimension_numbers = #tpu.dot_dimension_numbers<[1], [0], [0], [1], [0, 0, 1, 1], [], []>} : vector<8x8xf32>, vector<8x128xf32>, vector<8x128xf32> -> vector<8x128xf32>
    %cst_7 = arith.constant 0.000000e+00 : f32
    %11 = vector.broadcast %cst_7 : f32 to vector<8x128xf32>
    %12 = arith.maximumf %10, %11 : vector<8x128xf32>
    %cst_8 = arith.constant dense<0x7F800000> : vector<128xf32>
    %13 = vector.multi_reduction <minimumf>, %12, %cst_8 [0] : vector<8x128xf32> to vector<128xf32>
    %14 = vector.shape_cast %13 : vector<128xf32> to vector<1x128xf32>
    %15 = math.sqrt %14 : vector<1x128xf32>
    %16 = tpu.iota {dimensions = array<i32: 1>} : vector<1x128xi32>
    %17 = vector.broadcast %5 : i32 to vector<1x128xi32>
    %18 = arith.addi %17, %16 : vector<1x128xi32>
    %c16_i32 = arith.constant 16 : i32
    %19 = vector.broadcast %c16_i32 : i32 to vector<1x128xi32>
    %20 = arith.cmpi slt, %18, %19 : vector<1x128xi32>
    %cst_9 = arith.constant 0.000000e+00 : f32
    %21 = vector.broadcast %cst_9 : f32 to vector<1x128xf32>
    %22 = arith.select %20, %15, %21 : vector<1x128xi1>, vector<1x128xf32>
    %23 = vector.shape_cast %22 : vector<1x128xf32> to vector<1x1x128xf32>
    %cst_10 = arith.constant dense<0.000000e+00> : vector<1xf32>
    %24 = vector.multi_reduction <add>, %23, %cst_10 [1, 2] : vector<1x1x128xf32> to vector<1xf32>
    %25 = vector.shape_cast %24 : vector<1xf32> to vector<1x1x1xf32>
    %26 = vector.extract %25[0, 0, 0] : f32 from vector<1x1x1xf32>
    %27 = arith.addf %cst_3, %26 : f32
    %cst_11 = arith.constant dense<0x7F800000> : vector<8xf32>
    %28 = vector.multi_reduction <minimumf>, %12, %cst_11 [1] : vector<8x128xf32> to vector<8xf32>
    %29 = vector.shape_cast %28 : vector<8xf32> to vector<8x1xf32>
    %30 = arith.minimumf %3, %29 : vector<8x1xf32>
    %c1_i32 = arith.constant 1 : i32
    %31 = math.sqrt %30 : vector<8x1xf32>
    %32 = arith.addf %cst, %27 : f32
    %33 = vector.shape_cast %31 : vector<8x1xf32> to vector<1x8x1xf32>
    %cst_12 = arith.constant dense<0.000000e+00> : vector<1xf32>
    %34 = vector.multi_reduction <add>, %33, %cst_12 [1, 2] : vector<1x8x1xf32> to vector<1xf32>
    %35 = vector.shape_cast %34 : vector<1xf32> to vector<1x1x1xf32>
    %36 = vector.extract %35[0, 0, 0] : f32 from vector<1x1x1xf32>
    %37 = arith.addf %cst_0, %36 : f32
    %c1_i32_13 = arith.constant 1 : i32
    %38 = tpu.iota {dimensions = array<i32: 0>} : vector<8x128xi32>
    %39 = tpu.iota {dimensions = array<i32: 1>} : vector<8x128xi32>
    %c0_i32_14 = arith.constant 0 : i32
    %40 = vector.broadcast %c0_i32_14 : i32 to vector<8x128xi32>
    %41 = arith.cmpi eq, %38, %40 : vector<8x128xi32>
    %c0_i32_15 = arith.constant 0 : i32
    %42 = vector.broadcast %c0_i32_15 : i32 to vector<8x128xi32>
    %43 = arith.cmpi eq, %39, %42 : vector<8x128xi32>
    %44 = arith.andi %41, %43 : vector<8x128xi1>
    %c0_i32_16 = arith.constant 0 : i32
    %45 = vector.broadcast %c0_i32_16 : i32 to vector<8x128xi32>
    %46 = arith.cmpi eq, %38, %45 : vector<8x128xi32>
    %c1_i32_17 = arith.constant 1 : i32
    %47 = vector.broadcast %c1_i32_17 : i32 to vector<8x128xi32>
    %48 = arith.cmpi eq, %39, %47 : vector<8x128xi32>
    %49 = arith.andi %46, %48 : vector<8x128xi1>
    %cst_18 = arith.constant 0.000000e+00 : f32
    %50 = vector.broadcast %37 : f32 to vector<8x128xf32>
    %51 = vector.broadcast %cst_18 : f32 to vector<8x128xf32>
    %52 = arith.select %49, %50, %51 : vector<8x128xi1>, vector<8x128xf32>
    %53 = vector.broadcast %32 : f32 to vector<8x128xf32>
    %54 = arith.select %44, %53, %52 : vector<8x128xi1>, vector<8x128xf32>
    %c0_19 = arith.constant 0 : index
    %c0_20 = arith.constant 0 : index
    %c0_21 = arith.constant 0 : index
    %55 = vector.load %arg3[%c0_19, %c0_20, %c0_21] : memref<1x8x128xf32, #tpu.memory_space<vmem>>, vector<1x8x128xf32>
    %56 = vector.shape_cast %55 : vector<1x8x128xf32> to vector<8x128xf32>
    %57 = vector.shape_cast %54 : vector<8x128xf32> to vector<1x8x128xf32>
    tpu.vector_store %arg3[%c0_19, %c0_20, %c0_21], %57 {strides = array<i32>} : memref<1x8x128xf32, #tpu.memory_space<vmem>>, vector<1x8x128xf32>,
    return
  }
  func.func @transform_0(%arg0: i32) -> (i32, i32, i32) {
    %c0_i32 = arith.constant 0 : i32
    %c0_i32_0 = arith.constant 0 : i32
    %c0_i32_1 = arith.constant 0 : i32
    return %arg0, %c0_i32, %c0_i32_0 : i32, i32, i32
  }
  func.func @transform_1(%arg0: i32) -> (i32, i32, i32) {
    %c0_i32 = arith.constant 0 : i32
    %c0_i32_0 = arith.constant 0 : i32
    %c0_i32_1 = arith.constant 0 : i32
    return %arg0, %c0_i32, %c0_i32_0 : i32, i32, i32
  }
  func.func @transform_2(%arg0: i32) -> (i32, i32, i32) {
    %c0_i32 = arith.constant 0 : i32
    %c0_i32_0 = arith.constant 0 : i32
    %c0_i32_1 = arith.constant 0 : i32
    return %arg0, %c0_i32, %c0_i32_0 : i32, i32, i32
  }
}

</mosaic_0001>

<llo_original>
// kernel: tpu_custom_call.1
$region0: #{tpu_custom_call.1}
  #allocation0 [shape = 'u32[]', space=smem, size = 0x4, offset = 0x4, fixed_abs, tag = 'smem constant byte address 0x4 - core index']
  #allocation1 [shape = 'u32[72,128]{1,0:T(1,128)}', space=vmem, size = 0x9000, scoped, tag = 'internal scratch']
  %s0 = inlined_call_operand.hbm [shape: f32[2,8,8], index: 0, kind: input, shape index: {}]
  %s1 = inlined_call_operand.hbm [shape: f32[2,8,128], index: 1, kind: input, shape index: {}]
  %s2 = inlined_call_operand.hbm [shape: f32[2,8,128], index: 2, kind: output, shape index: {}]
  %s3 = sld [smem:[#allocation0]]
  $region49: #{tpu_custom_call.1} parent=0
    _
  %s5 = ssub.s32 1, %s3
  %s6 = scalar_select 0, %s5, %s3
  $region1: #{tpu_custom_call.1} parent=0
    #allocation2 [shape = 'u8[8192]{0}', space=vmem, size = 0x2000, scoped, tag = 'input window, operand 0']
    #allocation3 [shape = 's32[2]{0}', space=sflag, size = 0x8, scoped, tag = 'scoped memory for tpu_custom_call.1']
    #allocation4 [shape = 's32[2]{0}', space=sflag, size = 0x8, scoped, tag = 'scoped memory for tpu_custom_call.1']
    #allocation5 [shape = 'u8[8192]{0}', space=vmem, size = 0x2000, scoped, tag = 'input window, operand 1']
    #allocation6 [shape = 's32[2]{0}', space=sflag, size = 0x8, scoped, tag = 'scoped memory for tpu_custom_call.1']
    #allocation7 [shape = 'u8[8192]{0}', space=vmem, size = 0x2000, scoped, tag = 'output window, operand 0']
    %7 = vsyncpa [#allocation3], 0
    %s8 = scalar_lea.sflag [#allocation3], 1
    %9 = vsyncpa %s8, 0
    %10 = vsyncpa [#allocation6], 0
    %s11 = scalar_lea.sflag [#allocation6], 1
    %12 = vsyncpa %s11, 0
    %13 = vsyncpa [#allocation4], 0
    %s14 = scalar_lea.sflag [#allocation4], 1
    %15 = vsyncpa %s14, 0
    loop: start=0, step=1, limit=4
    $region2: #{tpu_custom_call.1} parent=1 // loop_pre_header
      _
    $region3: #{tpu_custom_call.1} parent=1 // loop_header
      %s17 = sphi 0, %s21
      %p18 = scmp.ge.s32.totalorder %s17, 4
      %s27 = sphi 0, %s29
      %s30 = sphi 0, %s27
      %s31 = sphi 0, %s30
      %s47 = sphi 0, %s31
      %s53 = sphi 0, %s55
      %s56 = sphi 0, %s53
      %s57 = sphi 0, %s56
      %s73 = sphi 0, %s57
      %s79 = sphi 0, %s81
      %s82 = sphi 0, %s79
      %s83 = sphi 0, %s82
      %s99 = sphi 0, %s83
    $region4: #{tpu_custom_call.1} parent=1 // loop_header_branch
      %20 = sbr.rel (%p18) target = $region8
    $region5: #{tpu_custom_call.1} parent=1 // loop_body
      %s22 = ssub.s32 %s17, 1
      %s23 = ssub.s32 %s17, 2
      %s24 = sadd.s32 %s17, 1
      %s25 = ssub.s32 %s17, %s24
      %p26 = scmp.eq.s32.totalorder %s25, 0
      %s28 = sadd.s32 %s27, 1
      %s29 = scalar_select %p26, %s27, %s28
      %p32 = pneg %p26
      %p33 = scmp.eq.s32.totalorder %s17, 1
      %p34 = por %p32, %p33
      %p35 = scmp.ne.s32.totalorder %s27, %s30
      %p36 = scmp.eq.s32.totalorder %s17, 0
      %p37 = por %p35, %p36
      %p38 = scmp.ne.s32.totalorder %s27, %s30
      %p39 = scmp.eq.s32.totalorder %s22, 1
      %p40 = por %p38, %p39
      %p41 = scmp.ne.s32.totalorder %s30, %s31
      %p42 = scmp.eq.s32.totalorder %s22, 0
      %p43 = por %p41, %p42
      %p44 = scmp.ne.s32.totalorder %s30, %s31
      %p45 = scmp.eq.s32.totalorder %s23, 1
      %p46 = por %p44, %p45
      %p48 = scmp.ne.s32.totalorder %s31, %s47
      %p49 = scmp.eq.s32.totalorder %s23, 0
      %p50 = por %p48, %p49
      %s51 = ssub.s32 %s17, %s24
      %p52 = scmp.eq.s32.totalorder %s51, 0
      %s54 = sadd.s32 %s53, 1
      %s55 = scalar_select %p52, %s53, %s54
      %p58 = pneg %p52
      %p59 = scmp.eq.s32.totalorder %s17, 1
      %p60 = por %p58, %p59
      %p61 = scmp.ne.s32.totalorder %s53, %s56
      %p62 = scmp.eq.s32.totalorder %s17, 0
      %p63 = por %p61, %p62
      %p64 = scmp.ne.s32.totalorder %s53, %s56
      %p65 = scmp.eq.s32.totalorder %s22, 1
      %p66 = por %p64, %p65
      %p67 = scmp.ne.s32.totalorder %s56, %s57
      %p68 = scmp.eq.s32.totalorder %s22, 0
      %p69 = por %p67, %p68
      %p70 = scmp.ne.s32.totalorder %s56, %s57
      %p71 = scmp.eq.s32.totalorder %s23, 1
      %p72 = por %p70, %p71
      %p74 = scmp.ne.s32.totalorder %s57, %s73
      %p75 = scmp.eq.s32.totalorder %s23, 0
      %p76 = por %p74, %p75
      %s77 = ssub.s32 %s17, %s24
      %p78 = scmp.eq.s32.totalorder %s77, 0
      %s80 = sadd.s32 %s79, 1
      %s81 = scalar_select %p78, %s79, %s80
      %p84 = pneg %p78
      %p85 = scmp.eq.s32.totalorder %s17, 1
      %p86 = por %p84, %p85
      %p87 = scmp.ne.s32.totalorder %s79, %s82
      %p88 = scmp.eq.s32.totalorder %s17, 0
      %p89 = por %p87, %p88
      %p90 = scmp.ne.s32.totalorder %s79, %s82
      %p91 = scmp.eq.s32.totalorder %s22, 1
      %p92 = por %p90, %p91
      %p93 = scmp.ne.s32.totalorder %s82, %s83
      %p94 = scmp.eq.s32.totalorder %s22, 0
      %p95 = por %p93, %p94
      %p96 = scmp.ne.s32.totalorder %s82, %s83
      %p97 = scmp.eq.s32.totalorder %s23, 1
      %p98 = por %p96, %p97
      %p100 = scmp.ne.s32.totalorder %s83, %s99
      %p101 = scmp.eq.s32.totalorder %s23, 0
      %p102 = por %p100, %p101
      %p103 = scmp.le.s32.totalorder 1, %s17
      %p104 = scmp.lt.s32.totalorder %s17, 3
      %p105 = pnand %p103, %p104
      %p106 = pneg %p105
      // Predicated region
      $region9: #{tpu_custom_call.1} parent=5 // pred_check
        _
      $region10: #{tpu_custom_call.1} parent=5 // pred_check_branch
        %108 = sbr.rel (%p105) target = $region12
      $region11: #{tpu_custom_call.1} parent=5 // pred_region
        %s109 = ssub.s32 %s17, 1
      $region12: #{tpu_custom_call.1} parent=5 // pred_fallthru
        _
      %p110 = scmp.lt.s32.totalorder %s17, 2
      // Predicated region
      $region13: #{tpu_custom_call.1} parent=5 // pred_check
        %p111 = pneg %p110
      $region14: #{tpu_custom_call.1} parent=5 // pred_check_branch
        %113 = sbr.rel (%p111) target = $region16
      $region15: #{tpu_custom_call.1} parent=5 // pred_region
        // Predicated region
        $region17: #{tpu_custom_call.1} parent=15 // pred_check
          %p114 = pneg %p37
        $region18: #{tpu_custom_call.1} parent=15 // pred_check_branch
          %116 = sbr.rel (%p114) target = $region20
        $region19: #{tpu_custom_call.1} parent=15 // pred_region
          %s117 = sand.u32 %s27, 1
          %s118 = scalar_lea.sflag [#allocation3], %s117
          %s119 = sand.u32 %s27, 1
          %s120 = smul.addr %s119, 8
          %s121 = scalar_lea.vmem [#allocation2], %s120
          %123 = vsyncadd %s118, 0
          %s124 = smul.addr %s17, 8
          %s125 = scalar_lea.hbm %s0, %s124
          %s127 = sshll.u32 %s125, 4
          %s128 = int_to_ptr.hbm [resolvable:$true] %s127
          %s129 = sshll.u32 %s121, 4
          %s130 = int_to_ptr.vmem [resolvable:$true] %s129
          %132 = dma.hbm_to_vmem [thread:$0]  %s128, 128, %s130, %s118
        $region20: #{tpu_custom_call.1} parent=15 // pred_fallthru
          _
        // Predicated region
        $region21: #{tpu_custom_call.1} parent=15 // pred_check
          %p133 = pneg %p63
        $region22: #{tpu_custom_call.1} parent=15 // pred_check_branch
          %135 = sbr.rel (%p133) target = $region24
        $region23: #{tpu_custom_call.1} parent=15 // pred_region
          %s136 = sand.u32 %s53, 1
          %s137 = scalar_lea.sflag [#allocation6], %s136
          %s138 = sand.u32 %s53, 1
          %s139 = smul.addr %s138, 8
          %s140 = scalar_lea.vmem [#allocation5], %s139
          %142 = vsyncadd %s137, 0
          %s143 = smul.addr %s17, 8
          %s144 = scalar_lea.hbm %s1, %s143
          %s146 = sshll.u32 %s144, 4
          %s147 = int_to_ptr.hbm [resolvable:$true] %s146
          %s148 = sshll.u32 %s140, 4
          %s149 = int_to_ptr.vmem [resolvable:$true] %s148
          %151 = dma.hbm_to_vmem [thread:$0]  %s147, 128, %s149, %s137
        $region24: #{tpu_custom_call.1} parent=15 // pred_fallthru
          _
      $region16: #{tpu_custom_call.1} parent=5 // pred_fallthru
        _
      %p152 = scmp.le.s32.totalorder 1, %s17
      %p153 = scmp.lt.s32.totalorder %s17, 3
      %p154 = pnand %p152, %p153
      %p155 = pneg %p154
      // Predicated region
      $region25: #{tpu_custom_call.1} parent=5 // pred_check
        _
      $region26: #{tpu_custom_call.1} parent=5 // pred_check_branch
        %157 = sbr.rel (%p154) target = $region28
      $region27: #{tpu_custom_call.1} parent=5 // pred_region
        %s158 = ssub.s32 %s17, 1
        %s159 = sand.u32 %s30, 1
        %s160 = scalar_lea.sflag [#allocation3], %s159
        %s161 = sand.u32 %s30, 1
        %s162 = smul.addr %s161, 8
        %s163 = scalar_lea.vmem [#allocation2], %s162
        // Predicated region
        $region29: #{tpu_custom_call.1} parent=27 // pred_check
          %p164 = pneg %p43
        $region30: #{tpu_custom_call.1} parent=27 // pred_check_branch
          %166 = sbr.rel (%p164) target = $region32
        $region31: #{tpu_custom_call.1} parent=27 // pred_region
          %168 = dma.done %s160, 128
        $region32: #{tpu_custom_call.1} parent=27 // pred_fallthru
          _
        %s169 = sand.u32 %s56, 1
        %s170 = scalar_lea.sflag [#allocation6], %s169
        %s171 = sand.u32 %s56, 1
        %s172 = smul.addr %s171, 8
        %s173 = scalar_lea.vmem [#allocation5], %s172
        // Predicated region
        $region33: #{tpu_custom_call.1} parent=27 // pred_check
          %p174 = pneg %p69
        $region34: #{tpu_custom_call.1} parent=27 // pred_check_branch
          %176 = sbr.rel (%p174) target = $region36
        $region35: #{tpu_custom_call.1} parent=27 // pred_region
          %178 = dma.done %s170, 128
        $region36: #{tpu_custom_call.1} parent=27 // pred_fallthru
          _
        %s179 = sand.u32 %s30, 1
        %s180 = scalar_lea.sflag [#allocation3], %s179
        %s181 = sand.u32 %s30, 1
        %s182 = smul.addr %s181, 8
        %s183 = scalar_lea.vmem [#allocation2], %s182
        %p184 = pneg %p43
        %p185 = pneg %p40
        %s186 = sand.u32 %s56, 1
        %s187 = scalar_lea.sflag [#allocation6], %s186
        %s188 = sand.u32 %s56, 1
        %s189 = smul.addr %s188, 8
        %s190 = scalar_lea.vmem [#allocation5], %s189
        %p191 = pneg %p69
        %p192 = pneg %p66
        %p193 = pneg %p95
        %p194 = pneg %p92
        %s195 = sand.u32 %s82, 1
        %s196 = scalar_lea.sflag [#allocation4], %s195
        %s197 = sand.u32 %s82, 1
        %s198 = smul.addr %s197, 8
        %s199 = scalar_lea.vmem [#allocation7], %s198
        %v200 = vld [vmem:[%s163] sm:$0xff]
        %v201 = vld [vmem:[%s173] sm:$0xff]
        %vm202 = vcmask 64512
        %v204 = vsel %vm202, %v200, 0
        %206 = vmatpush.msra.mxu0 0.0
        %207 = vmatpush.msra.mxu0 0.0
        %208 = vmatpush.msra.mxu0 0.0
        %209 = vmatpush.msra.mxu0 0.0
        %210 = vmatpush.msra.mxu0 0.0
        %211 = vmatpush.msra.mxu0 0.0
        %212 = vmatpush.msra.mxu0 0.0
        %213 = vmatpush.msra.mxu0 0.0
        %214 = vmatpush.msra.mxu0 0.0
        %215 = vmatpush.msra.mxu0 0.0
        %216 = vmatpush.msra.mxu0 0.0
        %217 = vmatpush.msra.mxu0 0.0
        %218 = vmatpush.msra.mxu0 0.0
        %219 = vmatpush.msra.mxu0 0.0
        %220 = vmatpush.msra.mxu0 0.0
        %221 = vmatpush.msra.mxu0 %v201
        %222 = vmatmul.f32.gmra.mxu0 %v204
        %v223 = vpop.f32.mrf.mxu0
        %v224 = vadd.f32 0.0, %v223
        %225 = vdwg.mxu0
        %v226 = vmax.f32 %v224, 0.0
        %v227 = vrot.slane %v226, 4
        %v228 = vmin.f32 %v226, %v227
        %v229 = vrot.slane %v228, 2
        %v230 = vmin.f32 %v228, %v229
        %v231 = vrot.slane %v230, 1
        %v232 = vmin.f32 %v230, %v231
        %v233 = vrsqrt.pop %v232
        %v234 = vmul.f32 %v233, %v232
        %v235 = vmul.f32 %v234, %v233
        %v236 = vmul.f32 0.5, %v235
        %v237 = vsub.f32 1.5, %v236
        %v238 = vmul.f32 %v233, %v237
        %v239 = vmul.f32 %v232, %v238
        %vm240 = vcmp.eq.f32.partialorder %v232, inf
        %v241 = vsel %vm240, %v232, %v239
        %vm242 = vcmp.eq.f32.partialorder %v232, 0.0
        %v243 = vand.u32 %v232, 2147483648
        %v244 = vsel %vm242, %v243, %v241
        %v245 = vlaneseq
        %v246 = vand.u32 %v245, 127
        %v247 = vstv 0
        %v248 = vadd.s32 %v247, %v246
        %vm249 = vcmp.lt.s32.totalorder %v248, 16
        %v250 = vsel %vm249, %v244, 0.0
        %vm251 = vcmask 1040384
        %v252 = vsel %vm251, %v250, 0.0
        %253 = vadd.xlane.f32.xlu0 %v252
        %v254 = vpop.xlane.xlu0 %253
        %v255 = vrot.slane %v254, 4
        %v256 = vadd.f32 %v254, %v255
        %v257 = vrot.slane %v256, 2
        %v258 = vadd.f32 %v256, %v257
        %v259 = vrot.slane %v258, 1
        %v260 = vadd.f32 %v258, %v259
        %s261 = vtos %v260
        %s262 = sadd.f32 %s261, 0.0
        %263 = vmin.xlane.f32.xlu0 %v226
        %v264 = vpop.xlane.xlu0 %263
        %v265 = vrsqrt.pop %v264
        %v266 = vmul.f32 %v265, %v264
        %v267 = vmul.f32 %v266, %v265
        %v268 = vmul.f32 0.5, %v267
        %v269 = vsub.f32 1.5, %v268
        %v270 = vmul.f32 %v265, %v269
        %v271 = vmul.f32 %v264, %v270
        %vm272 = vcmp.eq.f32.partialorder %v264, inf
        %v273 = vsel %vm272, %v264, %v271
        %vm274 = vcmp.eq.f32.partialorder %v264, 0.0
        %v275 = vand.u32 %v264, 2147483648
        %v276 = vsel %vm274, %v275, %v273
        %s277 = sadd.f32 %s262, 0.0
        %vm278 = vcmask 7168
        %v279 = vsel %vm278, %v276, 0.0
        %280 = vadd.xlane.f32.xlu0 %v279
        %v281 = vpop.xlane.xlu0 %280
        %v282 = vrot.slane %v281, 4
        %v283 = vadd.f32 %v281, %v282
        %v284 = vrot.slane %v283, 2
        %v285 = vadd.f32 %v283, %v284
        %v286 = vrot.slane %v285, 1
        %v287 = vadd.f32 %v285, %v286
        %s288 = vtos %v287
        %s289 = sadd.f32 %s288, 0.0
        %v290 = vlaneseq
        %v291 = vshrl.u32 %v290, 7
        %vm292 = vcmp.eq.s32.totalorder %v291, 0
        %vm293 = vcmp.eq.s32.totalorder %v246, 0
        %vm294 = vmand %vm292, %vm293
        %vm295 = vcmp.eq.s32.totalorder %v246, 1
        %vm296 = vmand %vm292, %vm295
        %v297 = vstv %s289
        %v298 = vsel %vm296, %v297, 0.0
        %v299 = vstv %s277
        %v300 = vsel %vm294, %v299, %v298
        %301 = vst [vmem:[%s199] sm:$0xff] %v300
        %s302 = sand.u32 %s82, 1
        %s303 = scalar_lea.sflag [#allocation4], %s302
        %s304 = sand.u32 %s82, 1
        %s305 = smul.addr %s304, 8
        %s306 = scalar_lea.vmem [#allocation7], %s305
        // Predicated region
        $region37: #{tpu_custom_call.1} parent=27 // pred_check
          %p307 = pneg %p92
        $region38: #{tpu_custom_call.1} parent=27 // pred_check_branch
          %309 = sbr.rel (%p307) target = $region40
        $region39: #{tpu_custom_call.1} parent=27 // pred_region
          %311 = vsyncadd %s303, 0
          %s312 = smul.addr %s22, 8
          %s313 = scalar_lea.hbm %s2, %s312
          %s315 = sshll.u32 %s306, 4
          %s316 = int_to_ptr.vmem [resolvable:$true] %s315
          %s317 = sshll.u32 %s313, 4
          %s318 = int_to_ptr.hbm [resolvable:$true] %s317
          %320 = dma.vmem_to_hbm [thread:$0]  %s316, 128, %s318, %s303
        $region40: #{tpu_custom_call.1} parent=27 // pred_fallthru
          _
      $region28: #{tpu_custom_call.1} parent=5 // pred_fallthru
        _
      %p321 = scmp.le.s32.totalorder 2, %s17
      // Predicated region
      $region41: #{tpu_custom_call.1} parent=5 // pred_check
        %p322 = pneg %p321
      $region42: #{tpu_custom_call.1} parent=5 // pred_check_branch
        %324 = sbr.rel (%p322) target = $region44
      $region43: #{tpu_custom_call.1} parent=5 // pred_region
        %s325 = ssub.s32 %s17, 2
        // Predicated region
        $region45: #{tpu_custom_call.1} parent=43 // pred_check
          %p326 = pneg %p98
        $region46: #{tpu_custom_call.1} parent=43 // pred_check_branch
          %328 = sbr.rel (%p326) target = $region48
        $region47: #{tpu_custom_call.1} parent=43 // pred_region
          %s329 = sand.u32 %s83, 1
          %s330 = scalar_lea.sflag [#allocation4], %s329
          %s331 = sand.u32 %s83, 1
          %s332 = smul.addr %s331, 8
          %s333 = scalar_lea.vmem [#allocation7], %s332
          %335 = dma.done %s330, 128
        $region48: #{tpu_custom_call.1} parent=43 // pred_fallthru
          _
      $region44: #{tpu_custom_call.1} parent=5 // pred_fallthru
        _
    $region6: #{tpu_custom_call.1} parent=1 // loop_footer
      %s21 = sadd.s32 1, %s17
    $region7: #{tpu_custom_call.1} parent=1 // loop_footer_branch
      %16 = sbr.rel target = $region3
    $region8: #{tpu_custom_call.1} parent=1 // loop_exit
      _
    %336 = vsyncpa [#allocation3], 1
    %s337 = scalar_lea.sflag [#allocation3], 1
    %338 = vsyncpa %s337, 1
    %339 = vsyncpa [#allocation6], 1
    %s340 = scalar_lea.sflag [#allocation6], 1
    %341 = vsyncpa %s340, 1
    %342 = vsyncpa [#allocation4], 1
    %s343 = scalar_lea.sflag [#allocation4], 1
    %344 = vsyncpa %s343, 1

</llo_original>
